<compile_context>
chip_gen: v7x
topology: tpu7x:2x2x1
jax: 0.10.0
libtpu: 0.0.40
codegen_flags: <defaults>
</compile_context>

<pallas_src>
import math

import jax
import jax.numpy as jnp
from jax.experimental import pallas as pl
from jax.experimental.pallas import tpu as pltpu


def conv1d_im2col_kernel(x_ref, w_ref, b_ref, o_ref):
    # x_ref: (tile_m, K*C_in) bf16      w_ref: (K*C_in, C_out) bf16
    # b_ref: (1, C_out) f32             o_ref: (tile_m, C_out) out_dtype
    acc = jnp.dot(x_ref[...], w_ref[...], preferred_element_type=jnp.float32)
    # Bias broadcast-add in f32 (one VALU pass), downcast only on store.
    o_ref[...] = (acc + b_ref[...]).astype(o_ref.dtype)


def _round_up(v, m):
    return (v + m - 1) // m * m


def _pick_row_tile(m):
    # 256-512-row tiles keep the 256-wide MXU (v6e/v7x) full and amortize the
    # per-grid-step overhead; tiny problems use one rounded-up tile.
    if m >= 1024:
        return 512
    if m >= 256:
        return 256
    return _round_up(m, 8)


def _tile_bytes(rows, cols, itemsize):
    # (8,128)-granule padded VMEM footprint of one buffer (estimate).
    return _round_up(rows, 8) * _round_up(cols, 128) * itemsize


def cnn_tokenizer_forward(x, w, b, *, stride=1, out_dtype=jnp.float32):
    """x: [B, T, C_in]; w: [K, C_in, C_out]; b: [C_out].

    Equivalent to the PyTorch module: permute(0,2,1) -> Conv1d(C_in, C_out, K,
    stride, no padding) -> permute(0,2,1).  Returns [B, T_out, C_out].
    """
    B, T, C_in = x.shape
    K, _, C_out = w.shape
    T_out = (T - K) // stride + 1
    KC = K * C_in
    M = B * T_out

    tile_m = _pick_row_tile(M)
    M_pad = _round_up(M, tile_m)
    n_tiles = M_pad // tile_m

    # Wrapper-side im2col in bf16 (endorsed restructure): one lane-packed matmul
    # operand instead of K shifted, sublane-unaligned slices inside the kernel.
    # No channel padding -> no 8x activation inflation.
    x_bf = x.astype(jnp.bfloat16)
    span = (T_out - 1) * stride + 1
    x_col = jnp.concatenate(
        [x_bf[:, k:k + span:stride, :] for k in range(K)], axis=-1
    ).reshape(M, KC)
    if M_pad != M:
        x_col = jnp.pad(x_col, ((0, M_pad - M), (0, 0)))

    w_flat = w.astype(jnp.bfloat16).reshape(KC, C_out)   # w_flat[k*C_in+ci, co]
    b2 = b.astype(jnp.float32).reshape(1, C_out)

    out_itemsize = jnp.dtype(out_dtype).itemsize
    # Per-step VMEM: double-buffered x tile + single-buffered weights/bias +
    # double-buffered output tile; x2 headroom, capped below v7x's 64 MiB.
    vmem_bytes = (2 * _tile_bytes(tile_m, KC, 2)
                  + _tile_bytes(KC, C_out, 2)
                  + _tile_bytes(1, C_out, 4)
                  + 2 * _tile_bytes(tile_m, C_out, out_itemsize))
    vmem_limit = int(min(max(2 * vmem_bytes, 8 << 20), 64 << 20))

    out_p = pl.pallas_call(
        conv1d_im2col_kernel,
        out_shape=jax.ShapeDtypeStruct((M_pad, C_out), out_dtype),
        grid=(n_tiles,),
        in_specs=[
            # Row tile of the flattened (B*T_out) activations.
            pl.BlockSpec((tile_m, KC), lambda i: (i, 0)),
            # Weights / bias: constant index_map -> fetched once; single buffer
            # halves their resident VMEM.
            pl.BlockSpec((KC, C_out), lambda i: (0, 0),
                         pipeline_mode=pl.Buffered(1)),
            pl.BlockSpec((1, C_out), lambda i: (0, 0),
                         pipeline_mode=pl.Buffered(1)),
        ],
        out_specs=pl.BlockSpec((tile_m, C_out), lambda i: (i, 0)),
        compiler_params=pltpu.CompilerParams(
            dimension_semantics=("parallel",),
            vmem_limit_bytes=vmem_limit),
    )(x_col, w_flat, b2)

    # Row strip only when M is not a tile multiple; never a channel strip.
    out = out_p[:M] if M_pad != M else out_p
    return out.reshape(B, T_out, C_out)


def init_params(key, input_dim, embed_dim, kernel_size):
    """Mirrors nn.Conv1d default init: U(-1/sqrt(fan_in), +1/sqrt(fan_in)),
    fan_in = input_dim * kernel_size.  Weight stored as [K, C_in, C_out]
    (transpose of PyTorch's [C_out, C_in, K])."""
    fan_in = input_dim * kernel_size
    bound = 1.0 / math.sqrt(fan_in)
    kw, kb = jax.random.split(key)
    w = jax.random.uniform(kw, (kernel_size, input_dim, embed_dim),
                           jnp.float32, -bound, bound)
    b = jax.random.uniform(kb, (embed_dim,), jnp.float32, -bound, bound)
    return w, b


if __name__ == "__main__":
    key = jax.random.PRNGKey(0)
    batch, seq, input_dim, embed_dim, ksize = 2, 16, 16, 32, 4

    kx, kp = jax.random.split(key)
    x = jax.random.normal(kx, (batch, seq, input_dim), jnp.float32)
    w, b = init_params(kp, input_dim, embed_dim, ksize)

    out = jax.block_until_ready(cnn_tokenizer_forward(x, w, b))

    # Pure-JAX reference with the same bf16-cast operands (f32 math), matching
    # PyTorch: permute -> Conv1d(stride=1, no padding) -> permute.
    xb = x.astype(jnp.bfloat16).astype(jnp.float32)
    wb = w.astype(jnp.bfloat16).astype(jnp.float32)
    T_out = seq - ksize + 1
    ref = jnp.zeros((batch, T_out, embed_dim), jnp.float32)
    for k in range(ksize):
        ref = ref + jnp.einsum("btc,cd->btd", xb[:, k:k + T_out, :], wb[k])
    ref = ref + b[None, None, :]

    assert out.shape == (batch, T_out, embed_dim), out.shape
    assert out.dtype == jnp.float32, out.dtype
    err = float(jnp.max(jnp.abs(out - ref)))
    assert jnp.allclose(out, ref, atol=2e-3, rtol=2e-3), err

    # bf16-output path (halves HBM writeback and output VMEM; f32 accumulate).
    out_bf16 = jax.block_until_ready(
        cnn_tokenizer_forward(x, w, b, out_dtype=jnp.bfloat16))
    assert out_bf16.dtype == jnp.bfloat16
    assert jnp.allclose(out_bf16.astype(jnp.float32), ref, atol=3e-2, rtol=3e-2)

    print("KERNEL_OK")
</pallas_src>

<mosaic_0001>
module attributes {stable_mosaic.version = 11 : i64} {
  func.func @conv1d_im2col_kernel(%arg0: i32, %arg1: memref<32x64xbf16, #tpu.memory_space<vmem>>, %arg2: memref<64x32xbf16, #tpu.memory_space<vmem>>, %arg3: memref<1x32xf32, #tpu.memory_space<vmem>>, %arg4: memref<32x32xf32, #tpu.memory_space<vmem>>) attributes {dimension_semantics = [#tpu.dimension_semantics<parallel>], iteration_bounds = array<i64: 1>, scalar_prefetch = 0 : i64, scratch_operands = 0 : i64, tpu.core_type = #tpu.core_type<tc>, window_params = [{transform_indices = @transform_0, window_bounds = array<i64: 32, 64>}, {pipeline_mode = #tpu.pipeline_mode<synchronous>, transform_indices = @transform_1, window_bounds = array<i64: 64, 32>}, {pipeline_mode = #tpu.pipeline_mode<synchronous>, transform_indices = @transform_2, window_bounds = array<i64: 1, 32>}, {transform_indices = @transform_3, window_bounds = array<i64: 32, 32>}]} {
    %c0 = arith.constant 0 : index
    %c0_0 = arith.constant 0 : index
    %0 = vector.load %arg1[%c0, %c0_0] : memref<32x64xbf16, #tpu.memory_space<vmem>>, vector<32x64xbf16>
    %c0_1 = arith.constant 0 : index
    %c0_2 = arith.constant 0 : index
    %1 = vector.load %arg2[%c0_1, %c0_2] : memref<64x32xbf16, #tpu.memory_space<vmem>>, vector<64x32xbf16>
    %cst = arith.constant dense<0.000000e+00> : vector<32x32xf32>
    %2 = tpu.matmul %0, %1, %cst {dimension_numbers = #tpu.dot_dimension_numbers<[1], [0], [0], [1], [0, 0, 1, 1], [], []>} : vector<32x64xbf16>, vector<64x32xbf16>, vector<32x32xf32> -> vector<32x32xf32>
    %c0_3 = arith.constant 0 : index
    %c0_4 = arith.constant 0 : index
    %3 = vector.load %arg3[%c0_3, %c0_4] : memref<1x32xf32, #tpu.memory_space<vmem>>, vector<1x32xf32>
    %4 = vector.broadcast %3 : vector<1x32xf32> to vector<32x32xf32>
    %5 = arith.addf %2, %4 : vector<32x32xf32>
    %c0_5 = arith.constant 0 : index
    %c0_6 = arith.constant 0 : index
    %6 = vector.load %arg4[%c0_5, %c0_6] : memref<32x32xf32, #tpu.memory_space<vmem>>, vector<32x32xf32>
    tpu.vector_store %arg4[%c0_5, %c0_6], %5 {strides = array<i32>} : memref<32x32xf32, #tpu.memory_space<vmem>>, vector<32x32xf32>,
    return
  }
  func.func @transform_0(%arg0: i32) -> (i32, i32) {
    %c0_i32 = arith.constant 0 : i32
    %c0_i32_0 = arith.constant 0 : i32
    return %arg0, %c0_i32 : i32, i32
  }
  func.func @transform_1(%arg0: i32) -> (i32, i32) {
    %c0_i32 = arith.constant 0 : i32
    %c0_i32_0 = arith.constant 0 : i32
    %c0_i32_1 = arith.constant 0 : i32
    return %c0_i32, %c0_i32_0 : i32, i32
  }
  func.func @transform_2(%arg0: i32) -> (i32, i32) {
    %c0_i32 = arith.constant 0 : i32
    %c0_i32_0 = arith.constant 0 : i32
    %c0_i32_1 = arith.constant 0 : i32
    return %c0_i32, %c0_i32_0 : i32, i32
  }
  func.func @transform_3(%arg0: i32) -> (i32, i32) {
    %c0_i32 = arith.constant 0 : i32
    %c0_i32_0 = arith.constant 0 : i32
    return %arg0, %c0_i32 : i32, i32
  }
}

</mosaic_0001>

<llo_original>
// kernel: tpu_custom_call.1
$region0: #{tpu_custom_call.1}
  #allocation0 [shape = 'u32[]', space=smem, size = 0x4, offset = 0x4, fixed_abs, tag = 'smem constant byte address 0x4 - core index']
  #allocation1 [shape = 'u32[144,128]{1,0:T(1,128)}', space=vmem, size = 0x12000, scoped, tag = 'internal scratch']
  %s0 = inlined_call_operand.vmem [shape: bf16[32,64], index: 0, kind: input, shape index: {}]
  %s1 = inlined_call_operand.vmem [shape: bf16[64,32], index: 1, kind: input, shape index: {}]
  %s2 = inlined_call_operand.vmem [shape: f32[1,32], index: 2, kind: input, shape index: {}]
  %s3 = inlined_call_operand.hbm [shape: f32[32,32], index: 3, kind: output, shape index: {}]
  %s4 = sld [smem:[#allocation0]]
  $region22: #{tpu_custom_call.1} parent=0
    _
  %s6 = ssub.s32 1, %s4
  %s7 = scalar_select 0, %s6, %s4
  $region1: #{tpu_custom_call.1} parent=0
    #allocation2 [shape = 'u8[16384]{0}', space=vmem, size = 0x4000, scoped, tag = 'output window, operand 0, single buffered']
    #allocation3 [shape = 's32[1]{0}', space=sflag, size = 0x4, scoped, tag = 'scoped memory for tpu_custom_call.1']
    %8 = vsyncpa [#allocation3], 0
    // Predicated region
    $region2: #{tpu_custom_call.1} parent=1 // pred_check
      _
    $region3: #{tpu_custom_call.1} parent=1 // pred_check_branch
      %10 = sbr.rel (0) target = $region5
    $region4: #{tpu_custom_call.1} parent=1 // pred_region
      _
    $region5: #{tpu_custom_call.1} parent=1 // pred_fallthru
      _
    // Predicated region
    $region6: #{tpu_custom_call.1} parent=1 // pred_check
      _
    $region7: #{tpu_custom_call.1} parent=1 // pred_check_branch
      %12 = sbr.rel (0) target = $region9
    $region8: #{tpu_custom_call.1} parent=1 // pred_region
      _
    $region9: #{tpu_custom_call.1} parent=1 // pred_fallthru
      _
    // Predicated region
    $region10: #{tpu_custom_call.1} parent=1 // pred_check
      _
    $region11: #{tpu_custom_call.1} parent=1 // pred_check_branch
      %14 = sbr.rel (0) target = $region13
    $region12: #{tpu_custom_call.1} parent=1 // pred_region
      _
    $region13: #{tpu_custom_call.1} parent=1 // pred_fallthru
      _
    %v16 = vld [vmem:[%s0] sm:$0xf]
    %v17 = vld [vmem:[%s0 + $0x4] sm:$0xf]
    %v18 = vld [vmem:[%s0 + $0x8] sm:$0xf]
    %v19 = vld [vmem:[%s0 + $0xc] sm:$0xf]
    %v20 = vld [vmem:[%s1] sm:$0xf]
    %v21 = vld [vmem:[%s1 + $0x4] sm:$0xf]
    %v22 = vld [vmem:[%s1 + $0x8] sm:$0xf]
    %v23 = vld [vmem:[%s1 + $0xc] sm:$0xf]
    %v24 = vld [vmem:[%s1 + $0x10] sm:$0xf]
    %v25 = vld [vmem:[%s1 + $0x14] sm:$0xf]
    %v26 = vld [vmem:[%s1 + $0x18] sm:$0xf]
    %v27 = vld [vmem:[%s1 + $0x1c] sm:$0xf]
    %v28 = vld [vmem:[%s2] sm:$0x1]
    %v30 = vlaneseq
    %v31 = vshrl.u32 %v30, 7
    %v32 = vsub.s32 0, %v31
    %v33 = vrot.slane %v28, %v32
    %v39 = vunpack.c.l.b16 %v16
    %v40 = vunpack.c.l.b16 %v17
    %v41 = vunpack.c.l.b16 %v18
    %v42 = vunpack.c.l.b16 %v19
    %v43 = vpack.c.b16 %v40, %v39
    %v44 = vpack.c.b16 %v42, %v41
    %v53 = vunpack.c.l.b16 %v20
    %v54 = vunpack.c.l.b16 %v21
    %v55 = vunpack.c.l.b16 %v22
    %v56 = vunpack.c.l.b16 %v23
    %v57 = vunpack.c.l.b16 %v24
    %v58 = vunpack.c.l.b16 %v25
    %v59 = vunpack.c.l.b16 %v26
    %v60 = vunpack.c.l.b16 %v27
    %v61 = vpack.c.b16 %v54, %v53
    %v62 = vpack.c.b16 %v56, %v55
    %v63 = vpack.c.b16 %v58, %v57
    %v64 = vpack.c.b16 %v60, %v59
    %vm69 = vcmask 523264
    %v71 = vsel %vm69, %v43, 0
    %v74 = vsel %vm69, %v44, 0
    %76 = vmatprep.subr.bf16.mxu0 0
    %77 = vmatpush1.bf16.msra.mxu0 %v61
    %78 = vmatprep.subr.bf16.mxu0 0
    %79 = vmatpush1.bf16.msra.mxu0 %v62
    %80 = vmatprep.subr.bf16.mxu0 0
    %81 = vmatpush1.bf16.msra.mxu0 %v63
    %82 = vmatprep.subr.bf16.mxu0 0
    %83 = vmatpush1.bf16.msra.mxu0 %v64
    %84 = vmatprep.subr.bf16.mxu0 0
    %85 = vmatpush1.bf16.msra.mxu0 0
    %86 = vmatprep.subr.bf16.mxu0 0
    %87 = vmatpush1.bf16.msra.mxu0 0
    %88 = vmatprep.subr.bf16.mxu0 0
    %89 = vmatpush1.bf16.msra.mxu0 0
    %90 = vmatprep.subr.bf16.mxu0 0
    %91 = vmatpush1.bf16.msra.mxu0 0
    %92 = vmatprep.subr.bf16.mxu0 0
    %93 = vmatpush1.bf16.msra.mxu0 0
    %94 = vmatprep.subr.bf16.mxu0 0
    %95 = vmatpush1.bf16.msra.mxu0 0
    %96 = vmatprep.subr.bf16.mxu0 0
    %97 = vmatpush1.bf16.msra.mxu0 0
    %98 = vmatprep.subr.bf16.mxu0 0
    %99 = vmatpush1.bf16.msra.mxu0 0
    %100 = vmatprep.subr.bf16.mxu0 0
    %101 = vmatpush1.bf16.msra.mxu0 0
    %102 = vmatprep.subr.bf16.mxu0 0
    %103 = vmatpush1.bf16.msra.mxu0 0
    %104 = vmatprep.subr.bf16.mxu0 0
    %105 = vmatpush1.bf16.msra.mxu0 0
    %106 = vmatprep.subr.bf16.mxu0 0
    %107 = vmatpush1.bf16.msra.mxu0 0
    %108 = vmatprep.mubr.bf16.mxu0 0
    %109 = vmatmul.mubr.bf16.gmra.mrb[0].mxu0 %v71
    %v110 = vpop.f32.mrb[0].mxu0
    %v111 = vadd.f32 %v33, %v110
    %v112 = vpop.f32.mrb[0].mxu0
    %v113 = vpop.f32.mrb[0].mxu0
    %v114 = vadd.f32 %v33, %v113
    %v115 = vpop.f32.mrb[0].mxu0
    %116 = vmatprep.mubr.bf16.mxu0 0
    %117 = vmatmul.mubr.bf16.gmra.mrb[0].mxu0 %v74
    %v118 = vpop.f32.mrb[0].mxu0
    %v119 = vadd.f32 %v33, %v118
    %v120 = vpop.f32.mrb[0].mxu0
    %v121 = vpop.f32.mrb[0].mxu0
    %v122 = vadd.f32 %v33, %v121
    %v123 = vpop.f32.mrb[0].mxu0
    %124 = vdwg.mxu0
    %vm125 = vcmask 261120
    %126 = vst.msk [vmem:[#allocation2] sm:$0xff] %vm125, %v111
    %127 = vst.msk [vmem:[#allocation2 + $0x8] sm:$0xff] %vm125, %v114
    %128 = vst.msk [vmem:[#allocation2 + $0x10] sm:$0xff] %vm125, %v119
    %129 = vst.msk [vmem:[#allocation2 + $0x18] sm:$0xff] %vm125, %v122
    // Predicated region
    $region14: #{tpu_custom_call.1} parent=1 // pred_check
      _
    $region15: #{tpu_custom_call.1} parent=1 // pred_check_branch
      %131 = sbr.rel (0) target = $region17
    $region16: #{tpu_custom_call.1} parent=1 // pred_region
      %s133 = ssub.s32 512, 512
      %134 = vsyncadd [#allocation3], %s133
      %s135 = sshll.u32 [#allocation2], 4
      %s136 = int_to_ptr.vmem [resolvable:$true] %s135
      %141 = dma.vmem_to_hbm [thread:$0]  %s136, 512, %s3, [#allocation3], 128, 128, 8
    $region17: #{tpu_custom_call.1} parent=1 // pred_fallthru
      _
    // Predicated region
    $region18: #{tpu_custom_call.1} parent=1 // pred_check
      _
    $region19: #{tpu_custom_call.1} parent=1 // pred_check_branch
      %143 = sbr.rel (0) target = $region21
    $region20: #{tpu_custom_call.1} parent=1 // pred_region
      %144 = dma.done [#allocation3], 512
    $region21: #{tpu_custom_call.1} parent=1 // pred_fallthru
      _
    %145 = vsyncpa [#allocation3], 1

</llo_original>
